<compile_context>
chip_gen: v5e
topology: v5e:2x2
jax: 0.10.0
libtpu: 0.0.40
codegen_flags: <defaults>
</compile_context>

<pallas_src>
import jax
import jax.numpy as jnp
from jax.experimental import pallas as pl
from jax.experimental.pallas import tpu as pltpu


def _round_up(x, m):
    return (x + m - 1) // m * m


def _patch_embed_kernel(p_ref, w_ref, b_ref, o_ref):
    # p_ref: (TM, Kp) bf16 patches; w_ref: (Kp, Ep) bf16 weight;
    # b_ref: (1, Ep) f32 bias; o_ref: (TM, Ep) output tile.
    acc = jnp.dot(p_ref[...], w_ref[...], preferred_element_type=jnp.float32)
    o_ref[...] = (acc + b_ref[...]).astype(o_ref.dtype)


def patch_embed_forward(x, weight, bias, patch_size, *, tm=256):
    """x: (B, C, H, W) NCHW; weight: (E, C, ph, pw); bias: (E,).
    Returns (B, num_patches, E), matching the PyTorch forward."""
    B, C, H, W = x.shape
    ph, pw = patch_size
    E = weight.shape[0]
    gh, gw = H // ph, W // pw
    N = gh * gw
    K = C * ph * pw
    M = B * N

    # --- glue: non-overlapping patch extraction (reshape/transpose only).
    # Done in bf16 so the extra HBM pass costs half the bytes of f32.
    # (If the caller can supply NHWC this becomes a pure reshape.)
    patches = x.astype(jnp.bfloat16).reshape(B, C, gh, ph, gw, pw)
    patches = jnp.transpose(patches, (0, 2, 4, 1, 3, 5)).reshape(M, K)

    # Conv weight (E, C, ph, pw) -> (K, E), same row-major flattening as patches.
    w_flat = jnp.transpose(weight.reshape(E, K)).astype(jnp.bfloat16)
    b_flat = bias.reshape(1, E).astype(jnp.float32)

    # Lane-dense padding: K, E up to multiples of 128; M up to a tile multiple.
    K_p = _round_up(K, 128)
    E_p = _round_up(E, 128)
    TM = min(tm, _round_up(M, 16))           # multiple of 16 (bf16 sublanes)
    M_p = _round_up(M, TM)

    patches = jnp.pad(patches, ((0, M_p - M), (0, K_p - K)))
    w_flat = jnp.pad(w_flat, ((0, K_p - K), (0, E_p - E)))
    b_flat = jnp.pad(b_flat, ((0, 0), (0, E_p - E)))

    out_dtype = x.dtype
    bytes_accessed = (
        M_p * K_p * 2            # patch reads (bf16)
        + K_p * E_p * 2          # weight (resident, bf16)
        + E_p * 4                # bias
        + M_p * E_p * jnp.dtype(out_dtype).itemsize  # output writes
    )

    out = pl.pallas_call(
        _patch_embed_kernel,
        out_shape=jax.ShapeDtypeStruct((M_p, E_p), out_dtype),
        grid_spec=pl.GridSpec(
            grid=(M_p // TM,),
            in_specs=[
                pl.BlockSpec((TM, K_p), lambda i: (i, 0)),   # row-tiled patches
                pl.BlockSpec((K_p, E_p), lambda i: (0, 0)),  # resident weight
                pl.BlockSpec((1, E_p), lambda i: (0, 0)),    # resident bias
            ],
            out_specs=pl.BlockSpec((TM, E_p), lambda i: (i, 0)),
        ),
        compiler_params=pltpu.CompilerParams(
            dimension_semantics=("parallel",),
        ),
        cost_estimate=pl.CostEstimate(
            flops=2 * M_p * K_p * E_p,
            transcendentals=0,
            bytes_accessed=bytes_accessed,
        ),
    )(patches, w_flat, b_flat)

    # Slice off K/E/M padding and restore (B, num_patches, E).
    return out[:M, :E].reshape(B, N, E)


if __name__ == "__main__":
    # Small shapes consistent with the module: img=16, patch=4, in_chans=4, embed=32
    B, C, H, W = 2, 4, 16, 16
    ph, pw = 4, 4
    E = 32

    key = jax.random.PRNGKey(0)
    kx, kw, kb = jax.random.split(key, 3)
    x = jax.random.normal(kx, (B, C, H, W), dtype=jnp.float32)
    # deterministic synthetic "conv" parameters (shapes from nn.Conv2d(C, E, 4, 4))
    weight = jax.random.normal(kw, (E, C, ph, pw), dtype=jnp.float32) * 0.02
    bias = jax.random.normal(kb, (E,), dtype=jnp.float32) * 0.02

    out = patch_embed_forward(x, weight, bias, (ph, pw))
    jax.block_until_ready(out)

    # sanity: compare against a plain-JAX f32 reference of the same computation
    # (loose tolerance since the kernel runs the matmul in bf16 with f32 accum)
    gh, gw = H // ph, W // pw
    patches_ref = jnp.transpose(
        x.reshape(B, C, gh, ph, gw, pw), (0, 2, 4, 1, 3, 5)
    ).reshape(B * gh * gw, C * ph * pw)
    ref = (patches_ref @ weight.reshape(E, -1).T + bias).reshape(B, gh * gw, E)
    assert out.shape == (B, gh * gw, E)
    assert jnp.allclose(out, ref, atol=2e-2, rtol=2e-2)

    print("KERNEL_OK")
</pallas_src>

<mosaic_0001>
module attributes {stable_mosaic.version = 11 : i64} {
  func.func @_patch_embed_kernel(%arg0: i32, %arg1: memref<32x128xbf16, #tpu.memory_space<vmem>>, %arg2: memref<128x128xbf16, #tpu.memory_space<vmem>>, %arg3: memref<1x128xf32, #tpu.memory_space<vmem>>, %arg4: memref<32x128xf32, #tpu.memory_space<vmem>>) attributes {dimension_semantics = [#tpu.dimension_semantics<parallel>], iteration_bounds = array<i64: 1>, scalar_prefetch = 0 : i64, scratch_operands = 0 : i64, tpu.core_type = #tpu.core_type<tc>, window_params = [{transform_indices = @transform_0, window_bounds = array<i64: 32, 128>}, {pipeline_mode = #tpu.pipeline_mode<synchronous>, transform_indices = @transform_1, window_bounds = array<i64: 128, 128>}, {pipeline_mode = #tpu.pipeline_mode<synchronous>, transform_indices = @transform_2, window_bounds = array<i64: 1, 128>}, {transform_indices = @transform_3, window_bounds = array<i64: 32, 128>}]} {
    %c0 = arith.constant 0 : index
    %c0_0 = arith.constant 0 : index
    %0 = vector.load %arg1[%c0, %c0_0] : memref<32x128xbf16, #tpu.memory_space<vmem>>, vector<32x128xbf16>
    %c0_1 = arith.constant 0 : index
    %c0_2 = arith.constant 0 : index
    %1 = vector.load %arg2[%c0_1, %c0_2] : memref<128x128xbf16, #tpu.memory_space<vmem>>, vector<128x128xbf16>
    %cst = arith.constant dense<0.000000e+00> : vector<32x128xf32>
    %2 = tpu.matmul %0, %1, %cst {dimension_numbers = #tpu.dot_dimension_numbers<[1], [0], [0], [1], [0, 0, 1, 1], [], []>} : vector<32x128xbf16>, vector<128x128xbf16>, vector<32x128xf32> -> vector<32x128xf32>
    %c0_3 = arith.constant 0 : index
    %c0_4 = arith.constant 0 : index
    %3 = vector.load %arg3[%c0_3, %c0_4] : memref<1x128xf32, #tpu.memory_space<vmem>>, vector<1x128xf32>
    %4 = vector.broadcast %3 : vector<1x128xf32> to vector<32x128xf32>
    %5 = arith.addf %2, %4 : vector<32x128xf32>
    %c0_5 = arith.constant 0 : index
    %c0_6 = arith.constant 0 : index
    %6 = vector.load %arg4[%c0_5, %c0_6] : memref<32x128xf32, #tpu.memory_space<vmem>>, vector<32x128xf32>
    tpu.vector_store %arg4[%c0_5, %c0_6], %5 {strides = array<i32>} : memref<32x128xf32, #tpu.memory_space<vmem>>, vector<32x128xf32>,
    return
  }
  func.func @transform_0(%arg0: i32) -> (i32, i32) {
    %c0_i32 = arith.constant 0 : i32
    %c0_i32_0 = arith.constant 0 : i32
    return %arg0, %c0_i32 : i32, i32
  }
  func.func @transform_1(%arg0: i32) -> (i32, i32) {
    %c0_i32 = arith.constant 0 : i32
    %c0_i32_0 = arith.constant 0 : i32
    %c0_i32_1 = arith.constant 0 : i32
    return %c0_i32, %c0_i32_0 : i32, i32
  }
  func.func @transform_2(%arg0: i32) -> (i32, i32) {
    %c0_i32 = arith.constant 0 : i32
    %c0_i32_0 = arith.constant 0 : i32
    %c0_i32_1 = arith.constant 0 : i32
    return %c0_i32, %c0_i32_0 : i32, i32
  }
  func.func @transform_3(%arg0: i32) -> (i32, i32) {
    %c0_i32 = arith.constant 0 : i32
    %c0_i32_0 = arith.constant 0 : i32
    return %arg0, %c0_i32 : i32, i32
  }
}

</mosaic_0001>

<llo_original>
// kernel: tpu_custom_call.1
$region0: #{tpu_custom_call.1}
  #allocation0 [shape = 'u32[]', space=smem, size = 0x4, offset = 0x4, fixed_abs, tag = 'smem constant byte address 0x4 - core index']
  #allocation1 [shape = 'u32[72,128]{1,0:T(1,128)}', space=vmem, size = 0x9000, scoped, tag = 'internal scratch']
  %s0 = inlined_call_operand.hbm [shape: bf16[32,128], index: 0, kind: input, shape index: {}]
  %s1 = inlined_call_operand.hbm [shape: bf16[128,128], index: 1, kind: input, shape index: {}]
  %s2 = inlined_call_operand.vmem [shape: f32[1,128], index: 2, kind: input, shape index: {}]
  %s3 = inlined_call_operand.hbm [shape: f32[32,128], index: 3, kind: output, shape index: {}]
  %s4 = sld [smem:[#allocation0]]
  $region30: #{tpu_custom_call.1} parent=0
    _
  %s6 = ssub.s32 1, %s4
  %s7 = scalar_select 0, %s6, %s4
  $region1: #{tpu_custom_call.1} parent=0
    #allocation2 [shape = 'u8[8192]{0}', space=vmem, size = 0x2000, scoped, tag = 'input window, operand 0, single buffered']
    #allocation3 [shape = 's32[1]{0}', space=sflag, size = 0x4, scoped, tag = 'scoped memory for tpu_custom_call.1']
    #allocation4 [shape = 's32[1]{0}', space=sflag, size = 0x4, scoped, tag = 'scoped memory for tpu_custom_call.1']
    #allocation5 [shape = 'u8[32768]{0}', space=vmem, size = 0x8000, scoped, tag = 'input window, operand 1, single buffered']
    #allocation6 [shape = 's32[1]{0}', space=sflag, size = 0x4, scoped, tag = 'scoped memory for tpu_custom_call.1']
    #allocation7 [shape = 'u8[16384]{0}', space=vmem, size = 0x4000, scoped, tag = 'output window, operand 0, single buffered']
    %8 = vsyncpa [#allocation3], 0
    %9 = vsyncpa [#allocation6], 0
    %10 = vsyncpa [#allocation4], 0
    // Predicated region
    $region2: #{tpu_custom_call.1} parent=1 // pred_check
      _
    $region3: #{tpu_custom_call.1} parent=1 // pred_check_branch
      %12 = sbr.rel (0) target = $region5
    $region4: #{tpu_custom_call.1} parent=1 // pred_region
      %14 = vsyncadd [#allocation3], 0
      %s15 = sshll.u32 %s0, 4
      %s16 = int_to_ptr.hbm [resolvable:$true] %s15
      %s17 = sshll.u32 [#allocation2], 4
      %s18 = int_to_ptr.vmem [resolvable:$true] %s17
      %23 = dma.hbm_to_vmem [thread:$0]  %s16, 256, %s18, [#allocation3], 64, 64, 4
    $region5: #{tpu_custom_call.1} parent=1 // pred_fallthru
      _
    // Predicated region
    $region6: #{tpu_custom_call.1} parent=1 // pred_check
      _
    $region7: #{tpu_custom_call.1} parent=1 // pred_check_branch
      %25 = sbr.rel (0) target = $region9
    $region8: #{tpu_custom_call.1} parent=1 // pred_region
      %27 = vsyncadd [#allocation6], 0
      %s28 = sshll.u32 %s1, 4
      %s29 = int_to_ptr.hbm [resolvable:$true] %s28
      %s30 = sshll.u32 [#allocation5], 4
      %s31 = int_to_ptr.vmem [resolvable:$true] %s30
      %36 = dma.hbm_to_vmem [thread:$0]  %s29, 1024, %s31, [#allocation6], 64, 64, 4
    $region9: #{tpu_custom_call.1} parent=1 // pred_fallthru
      _
    // Predicated region
    $region10: #{tpu_custom_call.1} parent=1 // pred_check
      _
    $region11: #{tpu_custom_call.1} parent=1 // pred_check_branch
      %38 = sbr.rel (0) target = $region13
    $region12: #{tpu_custom_call.1} parent=1 // pred_region
      _
    $region13: #{tpu_custom_call.1} parent=1 // pred_fallthru
      _
    // Predicated region
    $region14: #{tpu_custom_call.1} parent=1 // pred_check
      _
    $region15: #{tpu_custom_call.1} parent=1 // pred_check_branch
      %40 = sbr.rel (0) target = $region17
    $region16: #{tpu_custom_call.1} parent=1 // pred_region
      %42 = dma.done [#allocation3], 256
    $region17: #{tpu_custom_call.1} parent=1 // pred_fallthru
      _
    // Predicated region
    $region18: #{tpu_custom_call.1} parent=1 // pred_check
      _
    $region19: #{tpu_custom_call.1} parent=1 // pred_check_branch
      %44 = sbr.rel (0) target = $region21
    $region20: #{tpu_custom_call.1} parent=1 // pred_region
      %46 = dma.done [#allocation6], 1024
    $region21: #{tpu_custom_call.1} parent=1 // pred_fallthru
      _
    %v47 = vld [vmem:[#allocation2] sm:$0xf]
    %v48 = vld [vmem:[#allocation2 + $0x4] sm:$0xf]
    %v49 = vld [vmem:[#allocation2 + $0x8] sm:$0xf]
    %v50 = vld [vmem:[#allocation2 + $0xc] sm:$0xf]
    %v51 = vld [vmem:[#allocation5] sm:$0xf]
    %v52 = vld [vmem:[#allocation5 + $0x4] sm:$0xf]
    %v53 = vld [vmem:[#allocation5 + $0x8] sm:$0xf]
    %v54 = vld [vmem:[#allocation5 + $0xc] sm:$0xf]
    %v55 = vld [vmem:[#allocation5 + $0x10] sm:$0xf]
    %v56 = vld [vmem:[#allocation5 + $0x14] sm:$0xf]
    %v57 = vld [vmem:[#allocation5 + $0x18] sm:$0xf]
    %v58 = vld [vmem:[#allocation5 + $0x1c] sm:$0xf]
    %v59 = vld [vmem:[#allocation5 + $0x20] sm:$0xf]
    %v60 = vld [vmem:[#allocation5 + $0x24] sm:$0xf]
    %v61 = vld [vmem:[#allocation5 + $0x28] sm:$0xf]
    %v62 = vld [vmem:[#allocation5 + $0x2c] sm:$0xf]
    %v63 = vld [vmem:[#allocation5 + $0x30] sm:$0xf]
    %v64 = vld [vmem:[#allocation5 + $0x34] sm:$0xf]
    %v65 = vld [vmem:[#allocation5 + $0x38] sm:$0xf]
    %v66 = vld [vmem:[#allocation5 + $0x3c] sm:$0xf]
    %v67 = vld [vmem:[%s2] sm:$0x1]
    %v69 = vperm.slane %v67, 0
    %v75 = vunpack.c.l.b16 %v47
    %v76 = vunpack.c.l.b16 %v48
    %v77 = vunpack.c.l.b16 %v49
    %v78 = vunpack.c.l.b16 %v50
    %v79 = vpack.c.b16 %v76, %v75
    %v80 = vpack.c.b16 %v78, %v77
    %v99 = vunpack.c.l.b16 %v51
    %v100 = vunpack.c.l.b16 %v52
    %v101 = vunpack.c.l.b16 %v53
    %v102 = vunpack.c.l.b16 %v54
    %v103 = vunpack.c.l.b16 %v55
    %v104 = vunpack.c.l.b16 %v56
    %v105 = vunpack.c.l.b16 %v57
    %v106 = vunpack.c.l.b16 %v58
    %v107 = vunpack.c.l.b16 %v59
    %v108 = vunpack.c.l.b16 %v60
    %v109 = vunpack.c.l.b16 %v61
    %v110 = vunpack.c.l.b16 %v62
    %v111 = vunpack.c.l.b16 %v63
    %v112 = vunpack.c.l.b16 %v64
    %v113 = vunpack.c.l.b16 %v65
    %v114 = vunpack.c.l.b16 %v66
    %v115 = vpack.c.b16 %v100, %v99
    %v116 = vpack.c.b16 %v102, %v101
    %v117 = vpack.c.b16 %v104, %v103
    %v118 = vpack.c.b16 %v106, %v105
    %v119 = vpack.c.b16 %v108, %v107
    %v120 = vpack.c.b16 %v110, %v109
    %v121 = vpack.c.b16 %v112, %v111
    %v122 = vpack.c.b16 %v114, %v113
    %131 = vmatpush.bf16.msra.mxu0 %v122
    %132 = vmatpush.bf16.msra.mxu0 %v121
    %133 = vmatpush.bf16.msra.mxu0 %v120
    %134 = vmatpush.bf16.msra.mxu0 %v119
    %135 = vmatpush.bf16.msra.mxu0 %v118
    %136 = vmatpush.bf16.msra.mxu0 %v117
    %137 = vmatpush.bf16.msra.mxu0 %v116
    %138 = vmatpush.bf16.msra.mxu0 %v115
    %139 = vmatmul.bf16.gmra.mxu0 %v79
    %v140 = vpop.f32.mrf.mxu0
    %v141 = vadd.f32 %v69, %v140
    %v142 = vpop.f32.mrf.mxu0
    %v143 = vadd.f32 %v69, %v142
    %144 = vmatmul.bf16.gmra.mxu0 %v80
    %v145 = vpop.f32.mrf.mxu0
    %v146 = vadd.f32 %v69, %v145
    %v147 = vpop.f32.mrf.mxu0
    %v148 = vadd.f32 %v69, %v147
    %149 = vdwg.mxu0
    %150 = vst [vmem:[#allocation7] sm:$0xff] %v141
    %151 = vst [vmem:[#allocation7 + $0x8] sm:$0xff] %v143
    %152 = vst [vmem:[#allocation7 + $0x10] sm:$0xff] %v146
    %153 = vst [vmem:[#allocation7 + $0x18] sm:$0xff] %v148
    // Predicated region
    $region22: #{tpu_custom_call.1} parent=1 // pred_check
      _
    $region23: #{tpu_custom_call.1} parent=1 // pred_check_branch
      %155 = sbr.rel (0) target = $region25
    $region24: #{tpu_custom_call.1} parent=1 // pred_region
      %157 = vsyncadd [#allocation4], 0
      %s158 = sshll.u32 [#allocation7], 4
      %s159 = int_to_ptr.vmem [resolvable:$true] %s158
      %s160 = sshll.u32 %s3, 4
      %s161 = int_to_ptr.hbm [resolvable:$true] %s160
      %166 = dma.vmem_to_hbm [thread:$0]  %s159, 512, %s161, [#allocation4], 128, 128, 8
    $region25: #{tpu_custom_call.1} parent=1 // pred_fallthru
      _
    // Predicated region
    $region26: #{tpu_custom_call.1} parent=1 // pred_check
      _
    $region27: #{tpu_custom_call.1} parent=1 // pred_check_branch
      %168 = sbr.rel (0) target = $region29
    $region28: #{tpu_custom_call.1} parent=1 // pred_region
      %170 = dma.done [#allocation4], 512
    $region29: #{tpu_custom_call.1} parent=1 // pred_fallthru
      _
    %171 = vsyncpa [#allocation3], 1
    %172 = vsyncpa [#allocation6], 1
    %173 = vsyncpa [#allocation4], 1

</llo_original>
